<compile_context>
chip_gen: v5e
topology: v5e:2x2
jax: 0.10.0
libtpu: 0.0.40
codegen_flags: <defaults>
</compile_context>

<pallas_src>
import math
import jax
import jax.numpy as jnp
from jax.experimental import pallas as pl
from jax.experimental.pallas import tpu as pltpu

NUM_MIX = 8          # K : cfg.MODEL.PROBABILISTIC_MODELING.PPP.NUM_GAUSS_MIXTURES
NUM_CLASSES = 16     # C : cfg.MODEL.ROI_HEADS.NUM_CLASSES
COV_DIMS = 10        # 'full' covariance parameterization
K_PAD = ((NUM_MIX + 7) // 8) * 8   # mixture comps padded to a full sublane group
NEG_BIG = -1e30


# --------------------------- Pallas kernel ---------------------------------
def ppp_gmm_kernel(src_t_ref, a_ref, d_ref, c_ref, cls_ref, out_ref):
    """
    src_t_ref : (5, TN)     transposed rows [x1;y1;x2;y2;label]  (rows along lanes)
    a_ref     : (4*KP, 4)   row (i*KP + k) = Linv_k[i, :]
    d_ref     : (4*KP, 1)   row (i*KP + k) = (Linv_k @ mu_k)[i]
    c_ref     : (KP, 1)     const_k = -2 log(2*pi) - log|L_k| + log_gmm_weights_k
    cls_ref   : (KP, C)     per-component categorical log-probs
    out_ref   : (1, TN)     log PPP intensity per row (lane-dense)
    """
    kp = c_ref.shape[0]
    ncls = cls_ref.shape[1]

    a = a_ref[...]                                   # (4*KP, 4)  f32
    d = d_ref[...]                                   # (4*KP, 1)

    # whitened residual: y[i*KP+k, n] = Linv_k[i,:] @ x_n - (Linv_k mu_k)[i]
    # (exact f32 VPU broadcasts; contraction dim is 4, not worth the MXU)
    y = (a[:, 0:1] * src_t_ref[0:1, :]
         + a[:, 1:2] * src_t_ref[1:2, :]
         + a[:, 2:3] * src_t_ref[2:3, :]
         + a[:, 3:4] * src_t_ref[3:4, :]) - d        # (4*KP, TN)
    y2 = y * y
    maha = (y2[0:kp] + y2[kp:2 * kp]
            + y2[2 * kp:3 * kp] + y2[3 * kp:4 * kp])  # (KP, TN)

    scores = c_ref[...] - 0.5 * maha                 # (KP, TN)

    # categorical log-prob gather: exact f32 select-accumulate over C classes
    lbl = src_t_ref[4:5, :]                          # (1, TN)
    cw = cls_ref[...]                                # (KP, C)
    for c in range(ncls):
        scores = scores + jnp.where(lbl == jnp.float32(c), cw[:, c:c + 1], 0.0)

    # logsumexp over mixture components = sublane reduction -> (1, TN)
    m = jnp.max(scores, axis=0, keepdims=True)
    lse = m + jnp.log(jnp.sum(jnp.exp(scores - m), axis=0, keepdims=True))

    # labels outside [0, C) or non-integral: categorical prob is 0 -> -inf intensity
    valid = (lbl >= 0.0) & (lbl < jnp.float32(ncls)) & (lbl == jnp.floor(lbl))
    out_ref[...] = jnp.where(valid, lse, -jnp.inf)


def ppp_intensity_forward(src, a_mat, d_vec, const_vec, cls_mat):
    n = src.shape[0]
    n_pad = max(128, pl.cdiv(n, 128) * 128)
    # single grid step for small inputs; otherwise lane-dense multiples of 128
    if n_pad <= 512:
        tn = n_pad
    elif n_pad % 512 == 0:
        tn = 512
    elif n_pad % 256 == 0:
        tn = 256
    else:
        tn = 128
    kp = cls_mat.shape[0]

    # padded rows are zeros -> finite garbage outputs that are sliced away below
    src_t = jnp.pad(src.astype(jnp.float32), ((0, n_pad - n), (0, 0))).T  # (5, n_pad)

    out = pl.pallas_call(
        ppp_gmm_kernel,
        out_shape=jax.ShapeDtypeStruct((1, n_pad), jnp.float32),
        grid=(n_pad // tn,),
        in_specs=[
            pl.BlockSpec((5, tn), lambda i: (0, i)),
            pl.BlockSpec((4 * kp, 4), lambda i: (0, 0)),
            pl.BlockSpec((4 * kp, 1), lambda i: (0, 0)),
            pl.BlockSpec((kp, 1), lambda i: (0, 0)),
            pl.BlockSpec((kp, NUM_CLASSES), lambda i: (0, 0)),
        ],
        out_specs=pl.BlockSpec((1, tn), lambda i: (0, i)),
        compiler_params=pltpu.CompilerParams(dimension_semantics=("parallel",)),
    )(src_t, a_mat, d_vec, const_vec, cls_mat)
    return out[0, :n]


# ------------------------ parameter setup (glue) ----------------------------
def covariance_output_to_cholesky_jax(pred_cov):
    diag_vars = jnp.sqrt(jnp.exp(pred_cov[..., :4]))
    L = jnp.zeros(pred_cov.shape[:-1] + (4, 4), pred_cov.dtype)
    idx = jnp.arange(4)
    L = L.at[..., idx, idx].set(diag_vars)
    if pred_cov.shape[-1] > 4:
        tril_r = jnp.array([1, 2, 2, 3, 3, 3])   # torch.tril_indices(4,4,-1) order
        tril_c = jnp.array([0, 0, 1, 0, 1, 2])
        L = L.at[..., tril_r, tril_c].set(pred_cov[..., 4:])
    return L


def init_params(key):
    k1, k2, k3, k4 = jax.random.split(key, 4)
    log_gmm_weights = 0.1 * jax.random.normal(k1, (NUM_MIX,), jnp.float32)
    means_xywh = 0.5 + 0.16 * jax.random.normal(k2, (NUM_MIX, 4), jnp.float32)
    xywh_to_xyxy = jnp.array([[1, 0, -0.5, 0], [0, 1, 0, -0.5],
                              [1, 0, 0.5, 0], [0, 1, 0, 0.5]], jnp.float32)
    means = jnp.clip(jnp.einsum('ij,kj->ki', xywh_to_xyxy, means_xywh), 0.0, 1.0)
    gmm_chols = jax.random.normal(k3, (NUM_MIX, COV_DIMS), jnp.float32)
    cls_probs0 = (1.0 / NUM_CLASSES
                  + jax.random.uniform(k4, (NUM_MIX, NUM_CLASSES), jnp.float32) * 0.1)
    class_logits = jnp.log(cls_probs0 / (1.0 - cls_probs0))
    return log_gmm_weights, means, gmm_chols, class_logits


def build_kernel_params(log_gmm_weights, means, gmm_chols, class_logits):
    L = covariance_output_to_cholesky_jax(gmm_chols)             # (K,4,4)
    Linv = jnp.linalg.inv(L)
    logdetL = jnp.sum(jnp.log(jnp.diagonal(L, axis1=-2, axis2=-1)), axis=-1)
    cls_log_probs = jax.nn.log_softmax(class_logits, axis=-1)    # Categorical logits
    d = jnp.einsum('kij,kj->ki', Linv, means)                    # Linv_k mu_k  (K,4)
    # log_mix_k + log(ppp_rate) == log_gmm_weights_k ; all-ones scaling -> +0
    const = -2.0 * jnp.log(2.0 * jnp.pi) - logdetL + log_gmm_weights   # (K,)

    pad_k = K_PAD - NUM_MIX
    a_mat = jnp.pad(jnp.transpose(Linv, (1, 0, 2)), ((0, 0), (0, pad_k), (0, 0)))
    a_mat = a_mat.reshape(4 * K_PAD, 4).astype(jnp.float32)      # row i*KP + k
    d_vec = jnp.pad(jnp.transpose(d, (1, 0)), ((0, 0), (0, pad_k)))
    d_vec = d_vec.reshape(4 * K_PAD, 1).astype(jnp.float32)
    const_vec = jnp.pad(const[:, None], ((0, pad_k), (0, 0)),
                        constant_values=NEG_BIG).astype(jnp.float32)  # mask padded comps
    cls_mat = jnp.pad(cls_log_probs, ((0, pad_k), (0, 0))).astype(jnp.float32)
    return (a_mat, d_vec, const_vec, cls_mat), (Linv, logdetL, cls_log_probs)


# ------------------------------ reference -----------------------------------
def reference_forward(src, log_gmm_weights, means, Linv, logdetL, cls_log_probs):
    x = src[:, :4]
    lbl = src[:, 4].astype(jnp.int32)
    diff = x[:, None, :] - means[None, :, :]                     # (N,K,4)
    y = jnp.einsum('kij,nkj->nki', Linv, diff)
    maha = jnp.sum(y * y, axis=-1)
    reg_lp = -0.5 * (maha + 4.0 * jnp.log(2.0 * jnp.pi)) - logdetL[None, :]
    cls_lp = cls_log_probs.T[lbl]                                # (N,K)
    log_mix = jax.nn.log_softmax(log_gmm_weights)
    log_rate = jax.scipy.special.logsumexp(log_gmm_weights)
    return (jax.scipy.special.logsumexp(reg_lp + cls_lp + log_mix[None, :], axis=-1)
            + log_rate)


# -------------------------------- main ---------------------------------------
if __name__ == "__main__":
    key = jax.random.PRNGKey(0)
    k_params, kb, kl = jax.random.split(key, 3)

    log_gmm_weights, means, gmm_chols, class_logits = init_params(k_params)
    (a_mat, d_vec, const_vec, cls_mat), (Linv, logdetL, cls_log_probs) = \
        build_kernel_params(log_gmm_weights, means, gmm_chols, class_logits)

    N = 300
    boxes = jax.random.uniform(kb, (N, 4), jnp.float32)
    labels = jax.random.randint(kl, (N,), 0, NUM_CLASSES).astype(jnp.float32)
    src = jnp.concatenate([boxes, labels[:, None]], axis=-1)     # (N, 5)

    out = ppp_intensity_forward(src, a_mat, d_vec, const_vec, cls_mat)
    out = jax.block_until_ready(out)

    ref = reference_forward(src, log_gmm_weights, means, Linv, logdetL, cls_log_probs)
    assert out.shape == (N,)
    assert jnp.allclose(out, ref, rtol=1e-3, atol=1e-2), (
        float(jnp.max(jnp.abs(out - ref))))
    print("KERNEL_OK")
</pallas_src>

<mosaic_0001>
module attributes {stable_mosaic.version = 11 : i64} {
  func.func @ppp_gmm_kernel(%arg0: i32, %arg1: memref<5x384xf32, #tpu.memory_space<vmem>>, %arg2: memref<32x4xf32, #tpu.memory_space<vmem>>, %arg3: memref<32x1xf32, #tpu.memory_space<vmem>>, %arg4: memref<8x1xf32, #tpu.memory_space<vmem>>, %arg5: memref<8x16xf32, #tpu.memory_space<vmem>>, %arg6: memref<1x384xf32, #tpu.memory_space<vmem>>) attributes {dimension_semantics = [#tpu.dimension_semantics<parallel>], iteration_bounds = array<i64: 1>, scalar_prefetch = 0 : i64, scratch_operands = 0 : i64, tpu.core_type = #tpu.core_type<tc>, window_params = [{transform_indices = @transform_0, window_bounds = array<i64: 5, 384>}, {pipeline_mode = #tpu.pipeline_mode<synchronous>, transform_indices = @transform_1, window_bounds = array<i64: 32, 4>}, {pipeline_mode = #tpu.pipeline_mode<synchronous>, transform_indices = @transform_2, window_bounds = array<i64: 32, 1>}, {pipeline_mode = #tpu.pipeline_mode<synchronous>, transform_indices = @transform_3, window_bounds = array<i64: 8, 1>}, {pipeline_mode = #tpu.pipeline_mode<synchronous>, transform_indices = @transform_4, window_bounds = array<i64: 8, 16>}, {transform_indices = @transform_5, window_bounds = array<i64: 1, 384>}]} {
    %c0 = arith.constant 0 : index
    %c0_0 = arith.constant 0 : index
    %0 = vector.load %arg2[%c0, %c0_0] : memref<32x4xf32, #tpu.memory_space<vmem>>, vector<32x4xf32>
    %c0_1 = arith.constant 0 : index
    %c0_2 = arith.constant 0 : index
    %1 = vector.load %arg3[%c0_1, %c0_2] : memref<32x1xf32, #tpu.memory_space<vmem>>, vector<32x1xf32>
    %2 = vector.extract_strided_slice %0 {offsets = [0, 0], sizes = [32, 1], strides = [1, 1]} : vector<32x4xf32> to vector<32x1xf32>
    %c0_3 = arith.constant 0 : index
    %c0_4 = arith.constant 0 : index
    %3 = vector.load %arg1[%c0_3, %c0_4] : memref<5x384xf32, #tpu.memory_space<vmem>>, vector<1x384xf32>
    %4 = vector.broadcast %2 : vector<32x1xf32> to vector<32x384xf32>
    %5 = vector.broadcast %3 : vector<1x384xf32> to vector<32x384xf32>
    %6 = arith.mulf %4, %5 : vector<32x384xf32>
    %7 = vector.extract_strided_slice %0 {offsets = [0, 1], sizes = [32, 1], strides = [1, 1]} : vector<32x4xf32> to vector<32x1xf32>
    %c1 = arith.constant 1 : index
    %c0_5 = arith.constant 0 : index
    %8 = vector.load %arg1[%c1, %c0_5] : memref<5x384xf32, #tpu.memory_space<vmem>>, vector<1x384xf32>
    %9 = vector.broadcast %7 : vector<32x1xf32> to vector<32x384xf32>
    %10 = vector.broadcast %8 : vector<1x384xf32> to vector<32x384xf32>
    %11 = arith.mulf %9, %10 : vector<32x384xf32>
    %12 = arith.addf %6, %11 : vector<32x384xf32>
    %13 = vector.extract_strided_slice %0 {offsets = [0, 2], sizes = [32, 1], strides = [1, 1]} : vector<32x4xf32> to vector<32x1xf32>
    %c2 = arith.constant 2 : index
    %c0_6 = arith.constant 0 : index
    %14 = vector.load %arg1[%c2, %c0_6] : memref<5x384xf32, #tpu.memory_space<vmem>>, vector<1x384xf32>
    %15 = vector.broadcast %13 : vector<32x1xf32> to vector<32x384xf32>
    %16 = vector.broadcast %14 : vector<1x384xf32> to vector<32x384xf32>
    %17 = arith.mulf %15, %16 : vector<32x384xf32>
    %18 = arith.addf %12, %17 : vector<32x384xf32>
    %19 = vector.extract_strided_slice %0 {offsets = [0, 3], sizes = [32, 1], strides = [1, 1]} : vector<32x4xf32> to vector<32x1xf32>
    %c3 = arith.constant 3 : index
    %c0_7 = arith.constant 0 : index
    %20 = vector.load %arg1[%c3, %c0_7] : memref<5x384xf32, #tpu.memory_space<vmem>>, vector<1x384xf32>
    %21 = vector.broadcast %19 : vector<32x1xf32> to vector<32x384xf32>
    %22 = vector.broadcast %20 : vector<1x384xf32> to vector<32x384xf32>
    %23 = arith.mulf %21, %22 : vector<32x384xf32>
    %24 = arith.addf %18, %23 : vector<32x384xf32>
    %25 = vector.broadcast %1 : vector<32x1xf32> to vector<32x384xf32>
    %26 = arith.subf %24, %25 : vector<32x384xf32>
    %27 = arith.mulf %26, %26 : vector<32x384xf32>
    %28 = vector.extract_strided_slice %27 {offsets = [0, 0], sizes = [8, 384], strides = [1, 1]} : vector<32x384xf32> to vector<8x384xf32>
    %29 = vector.extract_strided_slice %27 {offsets = [8, 0], sizes = [8, 384], strides = [1, 1]} : vector<32x384xf32> to vector<8x384xf32>
    %30 = arith.addf %28, %29 : vector<8x384xf32>
    %31 = vector.extract_strided_slice %27 {offsets = [16, 0], sizes = [8, 384], strides = [1, 1]} : vector<32x384xf32> to vector<8x384xf32>
    %32 = arith.addf %30, %31 : vector<8x384xf32>
    %33 = vector.extract_strided_slice %27 {offsets = [24, 0], sizes = [8, 384], strides = [1, 1]} : vector<32x384xf32> to vector<8x384xf32>
    %34 = arith.addf %32, %33 : vector<8x384xf32>
    %c0_8 = arith.constant 0 : index
    %c0_9 = arith.constant 0 : index
    %35 = vector.load %arg4[%c0_8, %c0_9] : memref<8x1xf32, #tpu.memory_space<vmem>>, vector<8x1xf32>
    %cst = arith.constant 5.000000e-01 : f32
    %36 = vector.broadcast %cst : f32 to vector<8x384xf32>
    %37 = arith.mulf %36, %34 : vector<8x384xf32>
    %38 = vector.broadcast %35 : vector<8x1xf32> to vector<8x384xf32>
    %39 = arith.subf %38, %37 : vector<8x384xf32>
    %c4 = arith.constant 4 : index
    %c0_10 = arith.constant 0 : index
    %40 = vector.load %arg1[%c4, %c0_10] : memref<5x384xf32, #tpu.memory_space<vmem>>, vector<1x384xf32>
    %c0_11 = arith.constant 0 : index
    %c0_12 = arith.constant 0 : index
    %41 = vector.load %arg5[%c0_11, %c0_12] : memref<8x16xf32, #tpu.memory_space<vmem>>, vector<8x16xf32>
    %cst_13 = arith.constant 0.000000e+00 : f32
    %42 = vector.broadcast %cst_13 : f32 to vector<1x384xf32>
    %43 = arith.cmpf oeq, %40, %42 : vector<1x384xf32>
    %44 = vector.extract_strided_slice %41 {offsets = [0, 0], sizes = [8, 1], strides = [1, 1]} : vector<8x16xf32> to vector<8x1xf32>
    %cst_14 = arith.constant 0.000000e+00 : f32
    %45 = vector.shape_cast %43 : vector<1x384xi1> to vector<1x384xi1>
    %46 = vector.broadcast %45 : vector<1x384xi1> to vector<8x384xi1>
    %47 = vector.shape_cast %44 : vector<8x1xf32> to vector<8x1xf32>
    %48 = vector.broadcast %47 : vector<8x1xf32> to vector<8x384xf32>
    %49 = vector.broadcast %cst_14 : f32 to vector<8x384xf32>
    %50 = arith.select %46, %48, %49 : vector<8x384xi1>, vector<8x384xf32>
    %51 = arith.addf %39, %50 : vector<8x384xf32>
    %cst_15 = arith.constant 1.000000e+00 : f32
    %52 = vector.broadcast %cst_15 : f32 to vector<1x384xf32>
    %53 = arith.cmpf oeq, %40, %52 : vector<1x384xf32>
    %54 = vector.extract_strided_slice %41 {offsets = [0, 1], sizes = [8, 1], strides = [1, 1]} : vector<8x16xf32> to vector<8x1xf32>
    %cst_16 = arith.constant 0.000000e+00 : f32
    %55 = vector.shape_cast %53 : vector<1x384xi1> to vector<1x384xi1>
    %56 = vector.broadcast %55 : vector<1x384xi1> to vector<8x384xi1>
    %57 = vector.shape_cast %54 : vector<8x1xf32> to vector<8x1xf32>
    %58 = vector.broadcast %57 : vector<8x1xf32> to vector<8x384xf32>
    %59 = vector.broadcast %cst_16 : f32 to vector<8x384xf32>
    %60 = arith.select %56, %58, %59 : vector<8x384xi1>, vector<8x384xf32>
    %61 = arith.addf %51, %60 : vector<8x384xf32>
    %cst_17 = arith.constant 2.000000e+00 : f32
    %62 = vector.broadcast %cst_17 : f32 to vector<1x384xf32>
    %63 = arith.cmpf oeq, %40, %62 : vector<1x384xf32>
    %64 = vector.extract_strided_slice %41 {offsets = [0, 2], sizes = [8, 1], strides = [1, 1]} : vector<8x16xf32> to vector<8x1xf32>
    %cst_18 = arith.constant 0.000000e+00 : f32
    %65 = vector.shape_cast %63 : vector<1x384xi1> to vector<1x384xi1>
    %66 = vector.broadcast %65 : vector<1x384xi1> to vector<8x384xi1>
    %67 = vector.shape_cast %64 : vector<8x1xf32> to vector<8x1xf32>
    %68 = vector.broadcast %67 : vector<8x1xf32> to vector<8x384xf32>
    %69 = vector.broadcast %cst_18 : f32 to vector<8x384xf32>
    %70 = arith.select %66, %68, %69 : vector<8x384xi1>, vector<8x384xf32>
    %71 = arith.addf %61, %70 : vector<8x384xf32>
    %cst_19 = arith.constant 3.000000e+00 : f32
    %72 = vector.broadcast %cst_19 : f32 to vector<1x384xf32>
    %73 = arith.cmpf oeq, %40, %72 : vector<1x384xf32>
    %74 = vector.extract_strided_slice %41 {offsets = [0, 3], sizes = [8, 1], strides = [1, 1]} : vector<8x16xf32> to vector<8x1xf32>
    %cst_20 = arith.constant 0.000000e+00 : f32
    %75 = vector.shape_cast %73 : vector<1x384xi1> to vector<1x384xi1>
    %76 = vector.broadcast %75 : vector<1x384xi1> to vector<8x384xi1>
    %77 = vector.shape_cast %74 : vector<8x1xf32> to vector<8x1xf32>
    %78 = vector.broadcast %77 : vector<8x1xf32> to vector<8x384xf32>
    %79 = vector.broadcast %cst_20 : f32 to vector<8x384xf32>
    %80 = arith.select %76, %78, %79 : vector<8x384xi1>, vector<8x384xf32>
    %81 = arith.addf %71, %80 : vector<8x384xf32>
    %cst_21 = arith.constant 4.000000e+00 : f32
    %82 = vector.broadcast %cst_21 : f32 to vector<1x384xf32>
    %83 = arith.cmpf oeq, %40, %82 : vector<1x384xf32>
    %84 = vector.extract_strided_slice %41 {offsets = [0, 4], sizes = [8, 1], strides = [1, 1]} : vector<8x16xf32> to vector<8x1xf32>
    %cst_22 = arith.constant 0.000000e+00 : f32
    %85 = vector.shape_cast %83 : vector<1x384xi1> to vector<1x384xi1>
    %86 = vector.broadcast %85 : vector<1x384xi1> to vector<8x384xi1>
    %87 = vector.shape_cast %84 : vector<8x1xf32> to vector<8x1xf32>
    %88 = vector.broadcast %87 : vector<8x1xf32> to vector<8x384xf32>
    %89 = vector.broadcast %cst_22 : f32 to vector<8x384xf32>
    %90 = arith.select %86, %88, %89 : vector<8x384xi1>, vector<8x384xf32>
    %91 = arith.addf %81, %90 : vector<8x384xf32>
    %cst_23 = arith.constant 5.000000e+00 : f32
    %92 = vector.broadcast %cst_23 : f32 to vector<1x384xf32>
    %93 = arith.cmpf oeq, %40, %92 : vector<1x384xf32>
    %94 = vector.extract_strided_slice %41 {offsets = [0, 5], sizes = [8, 1], strides = [1, 1]} : vector<8x16xf32> to vector<8x1xf32>
    %cst_24 = arith.constant 0.000000e+00 : f32
    %95 = vector.shape_cast %93 : vector<1x384xi1> to vector<1x384xi1>
    %96 = vector.broadcast %95 : vector<1x384xi1> to vector<8x384xi1>
    %97 = vector.shape_cast %94 : vector<8x1xf32> to vector<8x1xf32>
    %98 = vector.broadcast %97 : vector<8x1xf32> to vector<8x384xf32>
    %99 = vector.broadcast %cst_24 : f32 to vector<8x384xf32>
    %100 = arith.select %96, %98, %99 : vector<8x384xi1>, vector<8x384xf32>
    %101 = arith.addf %91, %100 : vector<8x384xf32>
    %cst_25 = arith.constant 6.000000e+00 : f32
    %102 = vector.broadcast %cst_25 : f32 to vector<1x384xf32>
    %103 = arith.cmpf oeq, %40, %102 : vector<1x384xf32>
    %104 = vector.extract_strided_slice %41 {offsets = [0, 6], sizes = [8, 1], strides = [1, 1]} : vector<8x16xf32> to vector<8x1xf32>
    %cst_26 = arith.constant 0.000000e+00 : f32
    %105 = vector.shape_cast %103 : vector<1x384xi1> to vector<1x384xi1>
    %106 = vector.broadcast %105 : vector<1x384xi1> to vector<8x384xi1>
    %107 = vector.shape_cast %104 : vector<8x1xf32> to vector<8x1xf32>
    %108 = vector.broadcast %107 : vector<8x1xf32> to vector<8x384xf32>
    %109 = vector.broadcast %cst_26 : f32 to vector<8x384xf32>
    %110 = arith.select %106, %108, %109 : vector<8x384xi1>, vector<8x384xf32>
    %111 = arith.addf %101, %110 : vector<8x384xf32>
    %cst_27 = arith.constant 7.000000e+00 : f32
    %112 = vector.broadcast %cst_27 : f32 to vector<1x384xf32>
    %113 = arith.cmpf oeq, %40, %112 : vector<1x384xf32>
    %114 = vector.extract_strided_slice %41 {offsets = [0, 7], sizes = [8, 1], strides = [1, 1]} : vector<8x16xf32> to vector<8x1xf32>
    %cst_28 = arith.constant 0.000000e+00 : f32
    %115 = vector.shape_cast %113 : vector<1x384xi1> to vector<1x384xi1>
    %116 = vector.broadcast %115 : vector<1x384xi1> to vector<8x384xi1>
    %117 = vector.shape_cast %114 : vector<8x1xf32> to vector<8x1xf32>
    %118 = vector.broadcast %117 : vector<8x1xf32> to vector<8x384xf32>
    %119 = vector.broadcast %cst_28 : f32 to vector<8x384xf32>
    %120 = arith.select %116, %118, %119 : vector<8x384xi1>, vector<8x384xf32>
    %121 = arith.addf %111, %120 : vector<8x384xf32>
    %cst_29 = arith.constant 8.000000e+00 : f32
    %122 = vector.broadcast %cst_29 : f32 to vector<1x384xf32>
    %123 = arith.cmpf oeq, %40, %122 : vector<1x384xf32>
    %124 = vector.extract_strided_slice %41 {offsets = [0, 8], sizes = [8, 1], strides = [1, 1]} : vector<8x16xf32> to vector<8x1xf32>
    %cst_30 = arith.constant 0.000000e+00 : f32
    %125 = vector.shape_cast %123 : vector<1x384xi1> to vector<1x384xi1>
    %126 = vector.broadcast %125 : vector<1x384xi1> to vector<8x384xi1>
    %127 = vector.shape_cast %124 : vector<8x1xf32> to vector<8x1xf32>
    %128 = vector.broadcast %127 : vector<8x1xf32> to vector<8x384xf32>
    %129 = vector.broadcast %cst_30 : f32 to vector<8x384xf32>
    %130 = arith.select %126, %128, %129 : vector<8x384xi1>, vector<8x384xf32>
    %131 = arith.addf %121, %130 : vector<8x384xf32>
    %cst_31 = arith.constant 9.000000e+00 : f32
    %132 = vector.broadcast %cst_31 : f32 to vector<1x384xf32>
    %133 = arith.cmpf oeq, %40, %132 : vector<1x384xf32>
    %134 = vector.extract_strided_slice %41 {offsets = [0, 9], sizes = [8, 1], strides = [1, 1]} : vector<8x16xf32> to vector<8x1xf32>
    %cst_32 = arith.constant 0.000000e+00 : f32
    %135 = vector.shape_cast %133 : vector<1x384xi1> to vector<1x384xi1>
    %136 = vector.broadcast %135 : vector<1x384xi1> to vector<8x384xi1>
    %137 = vector.shape_cast %134 : vector<8x1xf32> to vector<8x1xf32>
    %138 = vector.broadcast %137 : vector<8x1xf32> to vector<8x384xf32>
    %139 = vector.broadcast %cst_32 : f32 to vector<8x384xf32>
    %140 = arith.select %136, %138, %139 : vector<8x384xi1>, vector<8x384xf32>
    %141 = arith.addf %131, %140 : vector<8x384xf32>
    %cst_33 = arith.constant 1.000000e+01 : f32
    %142 = vector.broadcast %cst_33 : f32 to vector<1x384xf32>
    %143 = arith.cmpf oeq, %40, %142 : vector<1x384xf32>
    %144 = vector.extract_strided_slice %41 {offsets = [0, 10], sizes = [8, 1], strides = [1, 1]} : vector<8x16xf32> to vector<8x1xf32>
    %cst_34 = arith.constant 0.000000e+00 : f32
    %145 = vector.shape_cast %143 : vector<1x384xi1> to vector<1x384xi1>
    %146 = vector.broadcast %145 : vector<1x384xi1> to vector<8x384xi1>
    %147 = vector.shape_cast %144 : vector<8x1xf32> to vector<8x1xf32>
    %148 = vector.broadcast %147 : vector<8x1xf32> to vector<8x384xf32>
    %149 = vector.broadcast %cst_34 : f32 to vector<8x384xf32>
    %150 = arith.select %146, %148, %149 : vector<8x384xi1>, vector<8x384xf32>
    %151 = arith.addf %141, %150 : vector<8x384xf32>
    %cst_35 = arith.constant 1.100000e+01 : f32
    %152 = vector.broadcast %cst_35 : f32 to vector<1x384xf32>
    %153 = arith.cmpf oeq, %40, %152 : vector<1x384xf32>
    %154 = vector.extract_strided_slice %41 {offsets = [0, 11], sizes = [8, 1], strides = [1, 1]} : vector<8x16xf32> to vector<8x1xf32>
    %cst_36 = arith.constant 0.000000e+00 : f32
    %155 = vector.shape_cast %153 : vector<1x384xi1> to vector<1x384xi1>
    %156 = vector.broadcast %155 : vector<1x384xi1> to vector<8x384xi1>
    %157 = vector.shape_cast %154 : vector<8x1xf32> to vector<8x1xf32>
    %158 = vector.broadcast %157 : vector<8x1xf32> to vector<8x384xf32>
    %159 = vector.broadcast %cst_36 : f32 to vector<8x384xf32>
    %160 = arith.select %156, %158, %159 : vector<8x384xi1>, vector<8x384xf32>
    %161 = arith.addf %151, %160 : vector<8x384xf32>
    %cst_37 = arith.constant 1.200000e+01 : f32
    %162 = vector.broadcast %cst_37 : f32 to vector<1x384xf32>
    %163 = arith.cmpf oeq, %40, %162 : vector<1x384xf32>
    %164 = vector.extract_strided_slice %41 {offsets = [0, 12], sizes = [8, 1], strides = [1, 1]} : vector<8x16xf32> to vector<8x1xf32>
    %cst_38 = arith.constant 0.000000e+00 : f32
    %165 = vector.shape_cast %163 : vector<1x384xi1> to vector<1x384xi1>
    %166 = vector.broadcast %165 : vector<1x384xi1> to vector<8x384xi1>
    %167 = vector.shape_cast %164 : vector<8x1xf32> to vector<8x1xf32>
    %168 = vector.broadcast %167 : vector<8x1xf32> to vector<8x384xf32>
    %169 = vector.broadcast %cst_38 : f32 to vector<8x384xf32>
    %170 = arith.select %166, %168, %169 : vector<8x384xi1>, vector<8x384xf32>
    %171 = arith.addf %161, %170 : vector<8x384xf32>
    %cst_39 = arith.constant 1.300000e+01 : f32
    %172 = vector.broadcast %cst_39 : f32 to vector<1x384xf32>
    %173 = arith.cmpf oeq, %40, %172 : vector<1x384xf32>
    %174 = vector.extract_strided_slice %41 {offsets = [0, 13], sizes = [8, 1], strides = [1, 1]} : vector<8x16xf32> to vector<8x1xf32>
    %cst_40 = arith.constant 0.000000e+00 : f32
    %175 = vector.shape_cast %173 : vector<1x384xi1> to vector<1x384xi1>
    %176 = vector.broadcast %175 : vector<1x384xi1> to vector<8x384xi1>
    %177 = vector.shape_cast %174 : vector<8x1xf32> to vector<8x1xf32>
    %178 = vector.broadcast %177 : vector<8x1xf32> to vector<8x384xf32>
    %179 = vector.broadcast %cst_40 : f32 to vector<8x384xf32>
    %180 = arith.select %176, %178, %179 : vector<8x384xi1>, vector<8x384xf32>
    %181 = arith.addf %171, %180 : vector<8x384xf32>
    %cst_41 = arith.constant 1.400000e+01 : f32
    %182 = vector.broadcast %cst_41 : f32 to vector<1x384xf32>
    %183 = arith.cmpf oeq, %40, %182 : vector<1x384xf32>
    %184 = vector.extract_strided_slice %41 {offsets = [0, 14], sizes = [8, 1], strides = [1, 1]} : vector<8x16xf32> to vector<8x1xf32>
    %cst_42 = arith.constant 0.000000e+00 : f32
    %185 = vector.shape_cast %183 : vector<1x384xi1> to vector<1x384xi1>
    %186 = vector.broadcast %185 : vector<1x384xi1> to vector<8x384xi1>
    %187 = vector.shape_cast %184 : vector<8x1xf32> to vector<8x1xf32>
    %188 = vector.broadcast %187 : vector<8x1xf32> to vector<8x384xf32>
    %189 = vector.broadcast %cst_42 : f32 to vector<8x384xf32>
    %190 = arith.select %186, %188, %189 : vector<8x384xi1>, vector<8x384xf32>
    %191 = arith.addf %181, %190 : vector<8x384xf32>
    %cst_43 = arith.constant 1.500000e+01 : f32
    %192 = vector.broadcast %cst_43 : f32 to vector<1x384xf32>
    %193 = arith.cmpf oeq, %40, %192 : vector<1x384xf32>
    %194 = vector.extract_strided_slice %41 {offsets = [0, 15], sizes = [8, 1], strides = [1, 1]} : vector<8x16xf32> to vector<8x1xf32>
    %cst_44 = arith.constant 0.000000e+00 : f32
    %195 = vector.shape_cast %193 : vector<1x384xi1> to vector<1x384xi1>
    %196 = vector.broadcast %195 : vector<1x384xi1> to vector<8x384xi1>
    %197 = vector.shape_cast %194 : vector<8x1xf32> to vector<8x1xf32>
    %198 = vector.broadcast %197 : vector<8x1xf32> to vector<8x384xf32>
    %199 = vector.broadcast %cst_44 : f32 to vector<8x384xf32>
    %200 = arith.select %196, %198, %199 : vector<8x384xi1>, vector<8x384xf32>
    %201 = arith.addf %191, %200 : vector<8x384xf32>
    %cst_45 = arith.constant dense<0xFF800000> : vector<384xf32>
    %202 = vector.multi_reduction <maximumf>, %201, %cst_45 [0] : vector<8x384xf32> to vector<384xf32>
    %203 = vector.shape_cast %202 : vector<384xf32> to vector<1x384xf32>
    %204 = vector.broadcast %203 : vector<1x384xf32> to vector<8x384xf32>
    %205 = arith.subf %201, %204 : vector<8x384xf32>
    %206 = math.exp %205 : vector<8x384xf32>
    %cst_46 = arith.constant dense<0.000000e+00> : vector<384xf32>
    %207 = vector.multi_reduction <add>, %206, %cst_46 [0] : vector<8x384xf32> to vector<384xf32>
    %208 = vector.shape_cast %207 : vector<384xf32> to vector<1x384xf32>
    %209 = math.log %208 : vector<1x384xf32>
    %210 = arith.addf %203, %209 : vector<1x384xf32>
    %cst_47 = arith.constant 0.000000e+00 : f32
    %211 = vector.broadcast %cst_47 : f32 to vector<1x384xf32>
    %212 = arith.cmpf oge, %40, %211 : vector<1x384xf32>
    %cst_48 = arith.constant 1.600000e+01 : f32
    %213 = vector.broadcast %cst_48 : f32 to vector<1x384xf32>
    %214 = arith.cmpf olt, %40, %213 : vector<1x384xf32>
    %215 = arith.andi %212, %214 : vector<1x384xi1>
    %216 = math.floor %40 : vector<1x384xf32>
    %217 = arith.cmpf oeq, %40, %216 : vector<1x384xf32>
    %218 = arith.andi %215, %217 : vector<1x384xi1>
    %cst_49 = arith.constant 0xFF800000 : f32
    %219 = vector.broadcast %cst_49 : f32 to vector<1x384xf32>
    %220 = arith.select %218, %210, %219 : vector<1x384xi1>, vector<1x384xf32>
    %c0_50 = arith.constant 0 : index
    %c0_51 = arith.constant 0 : index
    %221 = vector.load %arg6[%c0_50, %c0_51] : memref<1x384xf32, #tpu.memory_space<vmem>>, vector<1x384xf32>
    tpu.vector_store %arg6[%c0_50, %c0_51], %220 {strides = array<i32>} : memref<1x384xf32, #tpu.memory_space<vmem>>, vector<1x384xf32>,
    return
  }
  func.func @transform_0(%arg0: i32) -> (i32, i32) {
    %c0_i32 = arith.constant 0 : i32
    %c0_i32_0 = arith.constant 0 : i32
    return %c0_i32, %arg0 : i32, i32
  }
  func.func @transform_1(%arg0: i32) -> (i32, i32) {
    %c0_i32 = arith.constant 0 : i32
    %c0_i32_0 = arith.constant 0 : i32
    %c0_i32_1 = arith.constant 0 : i32
    return %c0_i32, %c0_i32_0 : i32, i32
  }
  func.func @transform_2(%arg0: i32) -> (i32, i32) {
    %c0_i32 = arith.constant 0 : i32
    %c0_i32_0 = arith.constant 0 : i32
    %c0_i32_1 = arith.constant 0 : i32
    return %c0_i32, %c0_i32_0 : i32, i32
  }
  func.func @transform_3(%arg0: i32) -> (i32, i32) {
    %c0_i32 = arith.constant 0 : i32
    %c0_i32_0 = arith.constant 0 : i32
    %c0_i32_1 = arith.constant 0 : i32
    return %c0_i32, %c0_i32_0 : i32, i32
  }
  func.func @transform_4(%arg0: i32) -> (i32, i32) {
    %c0_i32 = arith.constant 0 : i32
    %c0_i32_0 = arith.constant 0 : i32
    %c0_i32_1 = arith.constant 0 : i32
    return %c0_i32, %c0_i32_0 : i32, i32
  }
  func.func @transform_5(%arg0: i32) -> (i32, i32) {
    %c0_i32 = arith.constant 0 : i32
    %c0_i32_0 = arith.constant 0 : i32
    return %c0_i32, %arg0 : i32, i32
  }
}

</mosaic_0001>

<llo_original>
// kernel: tpu_custom_call.1
$region0: #{tpu_custom_call.1}
  #allocation0 [shape = 'u32[]', space=smem, size = 0x4, offset = 0x4, fixed_abs, tag = 'smem constant byte address 0x4 - core index']
  #allocation1 [shape = 'u32[72,128]{1,0:T(1,128)}', space=vmem, size = 0x9000, scoped, tag = 'internal scratch']
  %s0 = inlined_call_operand.vmem [shape: f32[5,384], index: 0, kind: input, shape index: {}]
  %s1 = inlined_call_operand.vmem [shape: f32[32,4], index: 1, kind: input, shape index: {}]
  %s2 = inlined_call_operand.vmem [shape: f32[32,1], index: 2, kind: input, shape index: {}]
  %s3 = inlined_call_operand.vmem [shape: f32[8,1], index: 3, kind: input, shape index: {}]
  %s4 = inlined_call_operand.vmem [shape: f32[8,16], index: 4, kind: input, shape index: {}]
  %s5 = inlined_call_operand.hbm [shape: f32[1,384], index: 5, kind: output, shape index: {}]
  %s6 = sld [smem:[#allocation0]]
  $region30: #{tpu_custom_call.1} parent=0
    _
  %s8 = ssub.s32 1, %s6
  %s9 = scalar_select 0, %s8, %s6
  $region1: #{tpu_custom_call.1} parent=0
    #allocation2 [shape = 'u8[1536]{0}', space=vmem, size = 0x800, scoped, tag = 'output window, operand 0, single buffered']
    #allocation3 [shape = 's32[1]{0}', space=sflag, size = 0x4, scoped, tag = 'scoped memory for tpu_custom_call.1']
    %10 = vsyncpa [#allocation3], 0
    // Predicated region
    $region2: #{tpu_custom_call.1} parent=1 // pred_check
      _
    $region3: #{tpu_custom_call.1} parent=1 // pred_check_branch
      %12 = sbr.rel (0) target = $region5
    $region4: #{tpu_custom_call.1} parent=1 // pred_region
      _
    $region5: #{tpu_custom_call.1} parent=1 // pred_fallthru
      _
    // Predicated region
    $region6: #{tpu_custom_call.1} parent=1 // pred_check
      _
    $region7: #{tpu_custom_call.1} parent=1 // pred_check_branch
      %14 = sbr.rel (0) target = $region9
    $region8: #{tpu_custom_call.1} parent=1 // pred_region
      _
    $region9: #{tpu_custom_call.1} parent=1 // pred_fallthru
      _
    // Predicated region
    $region10: #{tpu_custom_call.1} parent=1 // pred_check
      _
    $region11: #{tpu_custom_call.1} parent=1 // pred_check_branch
      %16 = sbr.rel (0) target = $region13
    $region12: #{tpu_custom_call.1} parent=1 // pred_region
      _
    $region13: #{tpu_custom_call.1} parent=1 // pred_fallthru
      _
    // Predicated region
    $region14: #{tpu_custom_call.1} parent=1 // pred_check
      _
    $region15: #{tpu_custom_call.1} parent=1 // pred_check_branch
      %18 = sbr.rel (0) target = $region17
    $region16: #{tpu_custom_call.1} parent=1 // pred_region
      _
    $region17: #{tpu_custom_call.1} parent=1 // pred_fallthru
      _
    // Predicated region
    $region18: #{tpu_custom_call.1} parent=1 // pred_check
      _
    $region19: #{tpu_custom_call.1} parent=1 // pred_check_branch
      %20 = sbr.rel (0) target = $region21
    $region20: #{tpu_custom_call.1} parent=1 // pred_region
      _
    $region21: #{tpu_custom_call.1} parent=1 // pred_fallthru
      _
    %v21 = vld [vmem:[%s1] sm:$0xff]
    %v22 = vld [vmem:[%s1 + $0x8] sm:$0xff]
    %v23 = vld [vmem:[%s1 + $0x10] sm:$0xff]
    %v24 = vld [vmem:[%s1 + $0x18] sm:$0xff]
    %v25 = vld [vmem:[%s2] sm:$0xff]
    %v26 = vld [vmem:[%s2 + $0x8] sm:$0xff]
    %v27 = vld [vmem:[%s2 + $0x10] sm:$0xff]
    %v28 = vld [vmem:[%s2 + $0x18] sm:$0xff]
    %v29 = vld [vmem:[%s0] ss:$8 sm:$0x7]
    %31 = vset.pattern.permute.xlu0 0
    %32 = vperm.xlu0 %31, %v21
    %v33 = vpop.permute.xlu0 %32
    %36 = vset.pattern.permute.xlu0 0
    %37 = vperm.xlu0 %36, %v22
    %v38 = vpop.permute.xlu0 %37
    %41 = vset.pattern.permute.xlu0 0
    %42 = vperm.xlu0 %41, %v23
    %v43 = vpop.permute.xlu0 %42
    %46 = vset.pattern.permute.xlu0 0
    %47 = vperm.xlu0 %46, %v24
    %v48 = vpop.permute.xlu0 %47
    %v51 = vperm.slane %v29, 0
    %v52 = vperm.slane %v29, 1
    %v53 = vperm.slane %v29, 2
    %v57 = vmul.f32 %v33, %v51
    %v58 = vmul.f32 %v33, %v52
    %v59 = vmul.f32 %v33, %v53
    %v60 = vmul.f32 %v38, %v51
    %v61 = vmul.f32 %v38, %v52
    %v62 = vmul.f32 %v38, %v53
    %v63 = vmul.f32 %v43, %v51
    %v64 = vmul.f32 %v43, %v52
    %v65 = vmul.f32 %v43, %v53
    %v66 = vmul.f32 %v48, %v51
    %v67 = vmul.f32 %v48, %v52
    %v68 = vmul.f32 %v48, %v53
    %s69 = scalar_lea.vmem %s0, 1
    %v70 = vld [vmem:[%s69] ss:$8 sm:$0x7]
    %71 = vset.pattern.permute.xlu0 1
    %72 = vperm.xlu0 %71, %v21
    %v73 = vpop.permute.xlu0 %72
    %75 = vset.pattern.permute.xlu0 1
    %76 = vperm.xlu0 %75, %v22
    %v77 = vpop.permute.xlu0 %76
    %79 = vset.pattern.permute.xlu0 1
    %80 = vperm.xlu0 %79, %v23
    %v81 = vpop.permute.xlu0 %80
    %83 = vset.pattern.permute.xlu0 1
    %84 = vperm.xlu0 %83, %v24
    %v85 = vpop.permute.xlu0 %84
    %v88 = vperm.slane %v70, 0
    %v89 = vperm.slane %v70, 1
    %v90 = vperm.slane %v70, 2
    %v94 = vmul.f32 %v73, %v88
    %v95 = vmul.f32 %v73, %v89
    %v96 = vmul.f32 %v73, %v90
    %v97 = vmul.f32 %v77, %v88
    %v98 = vmul.f32 %v77, %v89
    %v99 = vmul.f32 %v77, %v90
    %v100 = vmul.f32 %v81, %v88
    %v101 = vmul.f32 %v81, %v89
    %v102 = vmul.f32 %v81, %v90
    %v103 = vmul.f32 %v85, %v88
    %v104 = vmul.f32 %v85, %v89
    %v105 = vmul.f32 %v85, %v90
    %v106 = vadd.f32 %v57, %v94
    %v107 = vadd.f32 %v58, %v95
    %v108 = vadd.f32 %v59, %v96
    %v109 = vadd.f32 %v60, %v97
    %v110 = vadd.f32 %v61, %v98
    %v111 = vadd.f32 %v62, %v99
    %v112 = vadd.f32 %v63, %v100
    %v113 = vadd.f32 %v64, %v101
    %v114 = vadd.f32 %v65, %v102
    %v115 = vadd.f32 %v66, %v103
    %v116 = vadd.f32 %v67, %v104
    %v117 = vadd.f32 %v68, %v105
    %s118 = scalar_lea.vmem %s0, 2
    %v119 = vld [vmem:[%s118] ss:$8 sm:$0x7]
    %120 = vset.pattern.permute.xlu0 2
    %121 = vperm.xlu0 %120, %v21
    %v122 = vpop.permute.xlu0 %121
    %124 = vset.pattern.permute.xlu0 2
    %125 = vperm.xlu0 %124, %v22
    %v126 = vpop.permute.xlu0 %125
    %128 = vset.pattern.permute.xlu0 2
    %129 = vperm.xlu0 %128, %v23
    %v130 = vpop.permute.xlu0 %129
    %132 = vset.pattern.permute.xlu0 2
    %133 = vperm.xlu0 %132, %v24
    %v134 = vpop.permute.xlu0 %133
    %v137 = vperm.slane %v119, 0
    %v138 = vperm.slane %v119, 1
    %v139 = vperm.slane %v119, 2
    %v143 = vmul.f32 %v122, %v137
    %v144 = vmul.f32 %v122, %v138
    %v145 = vmul.f32 %v122, %v139
    %v146 = vmul.f32 %v126, %v137
    %v147 = vmul.f32 %v126, %v138
    %v148 = vmul.f32 %v126, %v139
    %v149 = vmul.f32 %v130, %v137
    %v150 = vmul.f32 %v130, %v138
    %v151 = vmul.f32 %v130, %v139
    %v152 = vmul.f32 %v134, %v137
    %v153 = vmul.f32 %v134, %v138
    %v154 = vmul.f32 %v134, %v139
    %v155 = vadd.f32 %v106, %v143
    %v156 = vadd.f32 %v107, %v144
    %v157 = vadd.f32 %v108, %v145
    %v158 = vadd.f32 %v109, %v146
    %v159 = vadd.f32 %v110, %v147
    %v160 = vadd.f32 %v111, %v148
    %v161 = vadd.f32 %v112, %v149
    %v162 = vadd.f32 %v113, %v150
    %v163 = vadd.f32 %v114, %v151
    %v164 = vadd.f32 %v115, %v152
    %v165 = vadd.f32 %v116, %v153
    %v166 = vadd.f32 %v117, %v154
    %s167 = scalar_lea.vmem %s0, 3
    %v168 = vld [vmem:[%s167] ss:$8 sm:$0x7]
    %169 = vset.pattern.permute.xlu0 3
    %170 = vperm.xlu0 %169, %v21
    %v171 = vpop.permute.xlu0 %170
    %173 = vset.pattern.permute.xlu0 3
    %174 = vperm.xlu0 %173, %v22
    %v175 = vpop.permute.xlu0 %174
    %177 = vset.pattern.permute.xlu0 3
    %178 = vperm.xlu0 %177, %v23
    %v179 = vpop.permute.xlu0 %178
    %181 = vset.pattern.permute.xlu0 3
    %182 = vperm.xlu0 %181, %v24
    %v183 = vpop.permute.xlu0 %182
    %v186 = vperm.slane %v168, 0
    %v187 = vperm.slane %v168, 1
    %v188 = vperm.slane %v168, 2
    %v192 = vmul.f32 %v171, %v186
    %v193 = vmul.f32 %v171, %v187
    %v194 = vmul.f32 %v171, %v188
    %v195 = vmul.f32 %v175, %v186
    %v196 = vmul.f32 %v175, %v187
    %v197 = vmul.f32 %v175, %v188
    %v198 = vmul.f32 %v179, %v186
    %v199 = vmul.f32 %v179, %v187
    %v200 = vmul.f32 %v179, %v188
    %v201 = vmul.f32 %v183, %v186
    %v202 = vmul.f32 %v183, %v187
    %v203 = vmul.f32 %v183, %v188
    %v204 = vadd.f32 %v155, %v192
    %v205 = vadd.f32 %v156, %v193
    %v206 = vadd.f32 %v157, %v194
    %v207 = vadd.f32 %v158, %v195
    %v208 = vadd.f32 %v159, %v196
    %v209 = vadd.f32 %v160, %v197
    %v210 = vadd.f32 %v161, %v198
    %v211 = vadd.f32 %v162, %v199
    %v212 = vadd.f32 %v163, %v200
    %v213 = vadd.f32 %v164, %v201
    %v214 = vadd.f32 %v165, %v202
    %v215 = vadd.f32 %v166, %v203
    %217 = vset.pattern.permute.xlu0 0
    %218 = vperm.xlu0 %217, %v25
    %v219 = vpop.permute.xlu0 %218
    %222 = vset.pattern.permute.xlu0 0
    %223 = vperm.xlu0 %222, %v26
    %v224 = vpop.permute.xlu0 %223
    %227 = vset.pattern.permute.xlu0 0
    %228 = vperm.xlu0 %227, %v27
    %v229 = vpop.permute.xlu0 %228
    %232 = vset.pattern.permute.xlu0 0
    %233 = vperm.xlu0 %232, %v28
    %v234 = vpop.permute.xlu0 %233
    %v236 = vsub.f32 %v204, %v219
    %v237 = vsub.f32 %v205, %v219
    %v238 = vsub.f32 %v206, %v219
    %v239 = vsub.f32 %v207, %v224
    %v240 = vsub.f32 %v208, %v224
    %v241 = vsub.f32 %v209, %v224
    %v242 = vsub.f32 %v210, %v229
    %v243 = vsub.f32 %v211, %v229
    %v244 = vsub.f32 %v212, %v229
    %v245 = vsub.f32 %v213, %v234
    %v246 = vsub.f32 %v214, %v234
    %v247 = vsub.f32 %v215, %v234
    %v248 = vmul.f32 %v236, %v236
    %v249 = vmul.f32 %v237, %v237
    %v250 = vmul.f32 %v238, %v238
    %v251 = vmul.f32 %v239, %v239
    %v252 = vmul.f32 %v240, %v240
    %v253 = vmul.f32 %v241, %v241
    %v254 = vmul.f32 %v242, %v242
    %v255 = vmul.f32 %v243, %v243
    %v256 = vmul.f32 %v244, %v244
    %v257 = vmul.f32 %v245, %v245
    %v258 = vmul.f32 %v246, %v246
    %v259 = vmul.f32 %v247, %v247
    %v260 = vadd.f32 %v248, %v251
    %v261 = vadd.f32 %v249, %v252
    %v262 = vadd.f32 %v250, %v253
    %v263 = vadd.f32 %v260, %v254
    %v264 = vadd.f32 %v261, %v255
    %v265 = vadd.f32 %v262, %v256
    %v266 = vadd.f32 %v263, %v257
    %v267 = vadd.f32 %v264, %v258
    %v268 = vadd.f32 %v265, %v259
    %v269 = vld [vmem:[%s3] sm:$0xff]
    %v270 = vmul.f32 %v266, 0.5
    %v271 = vmul.f32 %v267, 0.5
    %v272 = vmul.f32 %v268, 0.5
    %274 = vset.pattern.permute.xlu0 0
    %275 = vperm.xlu0 %274, %v269
    %v276 = vpop.permute.xlu0 %275
    %v278 = vsub.f32 %v276, %v270
    %v279 = vsub.f32 %v276, %v271
    %v280 = vsub.f32 %v276, %v272
    %s281 = scalar_lea.vmem %s0, 4
    %v282 = vld [vmem:[%s281] ss:$8 sm:$0x7]
    %v283 = vld [vmem:[%s4] sm:$0xff]
    %vm284 = vcmp.eq.f32.partialorder %v282, 0.0
    %v285 = vsel %vm284, 1, 0
    %v286 = vperm.slane %v285, 0
    %v287 = vperm.slane %v285, 1
    %v288 = vperm.slane %v285, 2
    %vm289 = vcmp.eq.s32.totalorder %v286, 1
    %vm290 = vcmp.eq.s32.totalorder %v287, 1
    %vm291 = vcmp.eq.s32.totalorder %v288, 1
    %293 = vset.pattern.permute.xlu0 0
    %294 = vperm.xlu0 %293, %v283
    %v295 = vpop.permute.xlu0 %294
    %v297 = vsel %vm289, %v295, 0.0
    %v298 = vsel %vm290, %v295, 0.0
    %v299 = vsel %vm291, %v295, 0.0
    %v300 = vadd.f32 %v278, %v297
    %v301 = vadd.f32 %v279, %v298
    %v302 = vadd.f32 %v280, %v299
    %vm303 = vcmp.eq.f32.partialorder %v282, 1.0
    %v304 = vsel %vm303, 1, 0
    %v305 = vperm.slane %v304, 0
    %v306 = vperm.slane %v304, 1
    %v307 = vperm.slane %v304, 2
    %vm308 = vcmp.eq.s32.totalorder %v305, 1
    %vm309 = vcmp.eq.s32.totalorder %v306, 1
    %vm310 = vcmp.eq.s32.totalorder %v307, 1
    %311 = vset.pattern.permute.xlu0 1
    %312 = vperm.xlu0 %311, %v283
    %v313 = vpop.permute.xlu0 %312
    %v315 = vsel %vm308, %v313, 0.0
    %v316 = vsel %vm309, %v313, 0.0
    %v317 = vsel %vm310, %v313, 0.0
    %v318 = vadd.f32 %v300, %v315
    %v319 = vadd.f32 %v301, %v316
    %v320 = vadd.f32 %v302, %v317
    %vm321 = vcmp.eq.f32.partialorder %v282, 2.0
    %v322 = vsel %vm321, 1, 0
    %v323 = vperm.slane %v322, 0
    %v324 = vperm.slane %v322, 1
    %v325 = vperm.slane %v322, 2
    %vm326 = vcmp.eq.s32.totalorder %v323, 1
    %vm327 = vcmp.eq.s32.totalorder %v324, 1
    %vm328 = vcmp.eq.s32.totalorder %v325, 1
    %329 = vset.pattern.permute.xlu0 2
    %330 = vperm.xlu0 %329, %v283
    %v331 = vpop.permute.xlu0 %330
    %v333 = vsel %vm326, %v331, 0.0
    %v334 = vsel %vm327, %v331, 0.0
    %v335 = vsel %vm328, %v331, 0.0
    %v336 = vadd.f32 %v318, %v333
    %v337 = vadd.f32 %v319, %v334
    %v338 = vadd.f32 %v320, %v335
    %vm339 = vcmp.eq.f32.partialorder %v282, 3.0
    %v340 = vsel %vm339, 1, 0
    %v341 = vperm.slane %v340, 0
    %v342 = vperm.slane %v340, 1
    %v343 = vperm.slane %v340, 2
    %vm344 = vcmp.eq.s32.totalorder %v341, 1
    %vm345 = vcmp.eq.s32.totalorder %v342, 1
    %vm346 = vcmp.eq.s32.totalorder %v343, 1
    %347 = vset.pattern.permute.xlu0 3
    %348 = vperm.xlu0 %347, %v283
    %v349 = vpop.permute.xlu0 %348
    %v351 = vsel %vm344, %v349, 0.0
    %v352 = vsel %vm345, %v349, 0.0
    %v353 = vsel %vm346, %v349, 0.0
    %v354 = vadd.f32 %v336, %v351
    %v355 = vadd.f32 %v337, %v352
    %v356 = vadd.f32 %v338, %v353
    %vm357 = vcmp.eq.f32.partialorder %v282, 4.0
    %v358 = vsel %vm357, 1, 0
    %v359 = vperm.slane %v358, 0
    %v360 = vperm.slane %v358, 1
    %v361 = vperm.slane %v358, 2
    %vm362 = vcmp.eq.s32.totalorder %v359, 1
    %vm363 = vcmp.eq.s32.totalorder %v360, 1
    %vm364 = vcmp.eq.s32.totalorder %v361, 1
    %365 = vset.pattern.permute.xlu0 4
    %366 = vperm.xlu0 %365, %v283
    %v367 = vpop.permute.xlu0 %366
    %v369 = vsel %vm362, %v367, 0.0
    %v370 = vsel %vm363, %v367, 0.0
    %v371 = vsel %vm364, %v367, 0.0
    %v372 = vadd.f32 %v354, %v369
    %v373 = vadd.f32 %v355, %v370
    %v374 = vadd.f32 %v356, %v371
    %vm375 = vcmp.eq.f32.partialorder %v282, 5.0
    %v376 = vsel %vm375, 1, 0
    %v377 = vperm.slane %v376, 0
    %v378 = vperm.slane %v376, 1
    %v379 = vperm.slane %v376, 2
    %vm380 = vcmp.eq.s32.totalorder %v377, 1
    %vm381 = vcmp.eq.s32.totalorder %v378, 1
    %vm382 = vcmp.eq.s32.totalorder %v379, 1
    %383 = vset.pattern.permute.xlu0 5
    %384 = vperm.xlu0 %383, %v283
    %v385 = vpop.permute.xlu0 %384
    %v387 = vsel %vm380, %v385, 0.0
    %v388 = vsel %vm381, %v385, 0.0
    %v389 = vsel %vm382, %v385, 0.0
    %v390 = vadd.f32 %v372, %v387
    %v391 = vadd.f32 %v373, %v388
    %v392 = vadd.f32 %v374, %v389
    %vm393 = vcmp.eq.f32.partialorder %v282, 6.0
    %v394 = vsel %vm393, 1, 0
    %v395 = vperm.slane %v394, 0
    %v396 = vperm.slane %v394, 1
    %v397 = vperm.slane %v394, 2
    %vm398 = vcmp.eq.s32.totalorder %v395, 1
    %vm399 = vcmp.eq.s32.totalorder %v396, 1
    %vm400 = vcmp.eq.s32.totalorder %v397, 1
    %401 = vset.pattern.permute.xlu0 6
    %402 = vperm.xlu0 %401, %v283
    %v403 = vpop.permute.xlu0 %402
    %v405 = vsel %vm398, %v403, 0.0
    %v406 = vsel %vm399, %v403, 0.0
    %v407 = vsel %vm400, %v403, 0.0
    %v408 = vadd.f32 %v390, %v405
    %v409 = vadd.f32 %v391, %v406
    %v410 = vadd.f32 %v392, %v407
    %vm411 = vcmp.eq.f32.partialorder %v282, 7.0
    %v412 = vsel %vm411, 1, 0
    %v413 = vperm.slane %v412, 0
    %v414 = vperm.slane %v412, 1
    %v415 = vperm.slane %v412, 2
    %vm416 = vcmp.eq.s32.totalorder %v413, 1
    %vm417 = vcmp.eq.s32.totalorder %v414, 1
    %vm418 = vcmp.eq.s32.totalorder %v415, 1
    %419 = vset.pattern.permute.xlu0 7
    %420 = vperm.xlu0 %419, %v283
    %v421 = vpop.permute.xlu0 %420
    %v423 = vsel %vm416, %v421, 0.0
    %v424 = vsel %vm417, %v421, 0.0
    %v425 = vsel %vm418, %v421, 0.0
    %v426 = vadd.f32 %v408, %v423
    %v427 = vadd.f32 %v409, %v424
    %v428 = vadd.f32 %v410, %v425
    %vm429 = vcmp.eq.f32.partialorder %v282, 8.0
    %v430 = vsel %vm429, 1, 0
    %v431 = vperm.slane %v430, 0
    %v432 = vperm.slane %v430, 1
    %v433 = vperm.slane %v430, 2
    %vm434 = vcmp.eq.s32.totalorder %v431, 1
    %vm435 = vcmp.eq.s32.totalorder %v432, 1
    %vm436 = vcmp.eq.s32.totalorder %v433, 1
    %437 = vset.pattern.permute.xlu0 8
    %438 = vperm.xlu0 %437, %v283
    %v439 = vpop.permute.xlu0 %438
    %v441 = vsel %vm434, %v439, 0.0
    %v442 = vsel %vm435, %v439, 0.0
    %v443 = vsel %vm436, %v439, 0.0
    %v444 = vadd.f32 %v426, %v441
    %v445 = vadd.f32 %v427, %v442
    %v446 = vadd.f32 %v428, %v443
    %vm447 = vcmp.eq.f32.partialorder %v282, 9.0
    %v448 = vsel %vm447, 1, 0
    %v449 = vperm.slane %v448, 0
    %v450 = vperm.slane %v448, 1
    %v451 = vperm.slane %v448, 2
    %vm452 = vcmp.eq.s32.totalorder %v449, 1
    %vm453 = vcmp.eq.s32.totalorder %v450, 1
    %vm454 = vcmp.eq.s32.totalorder %v451, 1
    %455 = vset.pattern.permute.xlu0 9
    %456 = vperm.xlu0 %455, %v283
    %v457 = vpop.permute.xlu0 %456
    %v459 = vsel %vm452, %v457, 0.0
    %v460 = vsel %vm453, %v457, 0.0
    %v461 = vsel %vm454, %v457, 0.0
    %v462 = vadd.f32 %v444, %v459
    %v463 = vadd.f32 %v445, %v460
    %v464 = vadd.f32 %v446, %v461
    %vm465 = vcmp.eq.f32.partialorder %v282, 10.0
    %v466 = vsel %vm465, 1, 0
    %v467 = vperm.slane %v466, 0
    %v468 = vperm.slane %v466, 1
    %v469 = vperm.slane %v466, 2
    %vm470 = vcmp.eq.s32.totalorder %v467, 1
    %vm471 = vcmp.eq.s32.totalorder %v468, 1
    %vm472 = vcmp.eq.s32.totalorder %v469, 1
    %473 = vset.pattern.permute.xlu0 10
    %474 = vperm.xlu0 %473, %v283
    %v475 = vpop.permute.xlu0 %474
    %v477 = vsel %vm470, %v475, 0.0
    %v478 = vsel %vm471, %v475, 0.0
    %v479 = vsel %vm472, %v475, 0.0
    %v480 = vadd.f32 %v462, %v477
    %v481 = vadd.f32 %v463, %v478
    %v482 = vadd.f32 %v464, %v479
    %vm483 = vcmp.eq.f32.partialorder %v282, 11.0
    %v484 = vsel %vm483, 1, 0
    %v485 = vperm.slane %v484, 0
    %v486 = vperm.slane %v484, 1
    %v487 = vperm.slane %v484, 2
    %vm488 = vcmp.eq.s32.totalorder %v485, 1
    %vm489 = vcmp.eq.s32.totalorder %v486, 1
    %vm490 = vcmp.eq.s32.totalorder %v487, 1
    %491 = vset.pattern.permute.xlu0 11
    %492 = vperm.xlu0 %491, %v283
    %v493 = vpop.permute.xlu0 %492
    %v495 = vsel %vm488, %v493, 0.0
    %v496 = vsel %vm489, %v493, 0.0
    %v497 = vsel %vm490, %v493, 0.0
    %v498 = vadd.f32 %v480, %v495
    %v499 = vadd.f32 %v481, %v496
    %v500 = vadd.f32 %v482, %v497
    %vm501 = vcmp.eq.f32.partialorder %v282, 12.0
    %v502 = vsel %vm501, 1, 0
    %v503 = vperm.slane %v502, 0
    %v504 = vperm.slane %v502, 1
    %v505 = vperm.slane %v502, 2
    %vm506 = vcmp.eq.s32.totalorder %v503, 1
    %vm507 = vcmp.eq.s32.totalorder %v504, 1
    %vm508 = vcmp.eq.s32.totalorder %v505, 1
    %509 = vset.pattern.permute.xlu0 12
    %510 = vperm.xlu0 %509, %v283
    %v511 = vpop.permute.xlu0 %510
    %v513 = vsel %vm506, %v511, 0.0
    %v514 = vsel %vm507, %v511, 0.0
    %v515 = vsel %vm508, %v511, 0.0
    %v516 = vadd.f32 %v498, %v513
    %v517 = vadd.f32 %v499, %v514
    %v518 = vadd.f32 %v500, %v515
    %vm519 = vcmp.eq.f32.partialorder %v282, 13.0
    %v520 = vsel %vm519, 1, 0
    %v521 = vperm.slane %v520, 0
    %v522 = vperm.slane %v520, 1
    %v523 = vperm.slane %v520, 2
    %vm524 = vcmp.eq.s32.totalorder %v521, 1
    %vm525 = vcmp.eq.s32.totalorder %v522, 1
    %vm526 = vcmp.eq.s32.totalorder %v523, 1
    %527 = vset.pattern.permute.xlu0 13
    %528 = vperm.xlu0 %527, %v283
    %v529 = vpop.permute.xlu0 %528
    %v531 = vsel %vm524, %v529, 0.0
    %v532 = vsel %vm525, %v529, 0.0
    %v533 = vsel %vm526, %v529, 0.0
    %v534 = vadd.f32 %v516, %v531
    %v535 = vadd.f32 %v517, %v532
    %v536 = vadd.f32 %v518, %v533
    %vm537 = vcmp.eq.f32.partialorder %v282, 14.0
    %v538 = vsel %vm537, 1, 0
    %v539 = vperm.slane %v538, 0
    %v540 = vperm.slane %v538, 1
    %v541 = vperm.slane %v538, 2
    %vm542 = vcmp.eq.s32.totalorder %v539, 1
    %vm543 = vcmp.eq.s32.totalorder %v540, 1
    %vm544 = vcmp.eq.s32.totalorder %v541, 1
    %545 = vset.pattern.permute.xlu0 14
    %546 = vperm.xlu0 %545, %v283
    %v547 = vpop.permute.xlu0 %546
    %v549 = vsel %vm542, %v547, 0.0
    %v550 = vsel %vm543, %v547, 0.0
    %v551 = vsel %vm544, %v547, 0.0
    %v552 = vadd.f32 %v534, %v549
    %v553 = vadd.f32 %v535, %v550
    %v554 = vadd.f32 %v536, %v551
    %vm555 = vcmp.eq.f32.partialorder %v282, 15.0
    %v556 = vsel %vm555, 1, 0
    %v557 = vperm.slane %v556, 0
    %v558 = vperm.slane %v556, 1
    %v559 = vperm.slane %v556, 2
    %vm560 = vcmp.eq.s32.totalorder %v557, 1
    %vm561 = vcmp.eq.s32.totalorder %v558, 1
    %vm562 = vcmp.eq.s32.totalorder %v559, 1
    %563 = vset.pattern.permute.xlu0 15
    %564 = vperm.xlu0 %563, %v283
    %v565 = vpop.permute.xlu0 %564
    %v567 = vsel %vm560, %v565, 0.0
    %v568 = vsel %vm561, %v565, 0.0
    %v569 = vsel %vm562, %v565, 0.0
    %v570 = vadd.f32 %v552, %v567
    %v571 = vadd.f32 %v553, %v568
    %v572 = vadd.f32 %v554, %v569
    %v573 = vrot.slane %v570, 4
    %v574 = vmax.f32 %v570, %v573
    %v575 = vrot.slane %v574, 2
    %v576 = vmax.f32 %v574, %v575
    %v577 = vrot.slane %v576, 1
    %v578 = vmax.f32 %v576, %v577
    %v579 = vrot.slane %v571, 4
    %v580 = vmax.f32 %v571, %v579
    %v581 = vrot.slane %v580, 2
    %v582 = vmax.f32 %v580, %v581
    %v583 = vrot.slane %v582, 1
    %v584 = vmax.f32 %v582, %v583
    %v585 = vrot.slane %v572, 4
    %v586 = vmax.f32 %v572, %v585
    %v587 = vrot.slane %v586, 2
    %v588 = vmax.f32 %v586, %v587
    %v589 = vrot.slane %v588, 1
    %v590 = vmax.f32 %v588, %v589
    %v591 = vsub.f32 %v570, %v578
    %v592 = vsub.f32 %v571, %v584
    %v593 = vsub.f32 %v572, %v590
    %v594 = vmul.f32 %v591, 1.442695
    %v595 = vpow.pop %v594
    %v596 = vmul.f32 %v592, 1.442695
    %v597 = vpow.pop %v596
    %v598 = vmul.f32 %v593, 1.442695
    %v599 = vpow.pop %v598
    %v600 = vrot.slane %v595, 4
    %v601 = vadd.f32 %v595, %v600
    %v602 = vrot.slane %v601, 2
    %v603 = vadd.f32 %v601, %v602
    %v604 = vrot.slane %v603, 1
    %v605 = vadd.f32 %v603, %v604
    %v606 = vrot.slane %v597, 4
    %v607 = vadd.f32 %v597, %v606
    %v608 = vrot.slane %v607, 2
    %v609 = vadd.f32 %v607, %v608
    %v610 = vrot.slane %v609, 1
    %v611 = vadd.f32 %v609, %v610
    %v612 = vrot.slane %v599, 4
    %v613 = vadd.f32 %v599, %v612
    %v614 = vrot.slane %v613, 2
    %v615 = vadd.f32 %v613, %v614
    %v616 = vrot.slane %v615, 1
    %v617 = vadd.f32 %v615, %v616
    %v618 = vlog2.pop %v605
    %v619 = vmul.f32 %v618, 0.6931472
    %v620 = vlog2.pop %v611
    %v621 = vmul.f32 %v620, 0.6931472
    %v622 = vlog2.pop %v617
    %v623 = vmul.f32 %v622, 0.6931472
    %v624 = vadd.f32 %v578, %v619
    %v625 = vadd.f32 %v584, %v621
    %v626 = vadd.f32 %v590, %v623
    %vm627 = vcmp.ge.f32.partialorder %v282, 0.0
    %vm628 = vcmp.lt.f32.partialorder %v282, 16.0
    %vm629 = vmand %vm627, %vm628
    %v630 = vfloor.f32 %v282
    %vm631 = vcmp.eq.f32.partialorder %v282, %v630
    %vm632 = vmand %vm629, %vm631
    %v636 = vrot.slane %v625, 7
    %v637 = vrot.slane %v626, 6
    %vm638 = vcmask 1040384
    %v639 = vsel %vm638, %v624, %v636
    %vm640 = vcmask 1041408
    %v641 = vsel %vm640, %v639, %v637
    %v643 = vsel %vm632, %v641, -inf
    %v644 = vlaneseq
    %vm645 = vcmp.ge.s32.totalorder %v644, 0
    %vm646 = vcmp.lt.s32.totalorder %v644, 384
    %vm647 = vmand %vm645, %vm646
    %648 = vst.msk [vmem:[#allocation2] sm:$0x7] %vm647, %v643
    // Predicated region
    $region22: #{tpu_custom_call.1} parent=1 // pred_check
      _
    $region23: #{tpu_custom_call.1} parent=1 // pred_check_branch
      %650 = sbr.rel (0) target = $region25
    $region24: #{tpu_custom_call.1} parent=1 // pred_region
      %652 = vsyncadd [#allocation3], 0
      %s654 = sshll.u32 [#allocation2], 4
      %s655 = int_to_ptr.vmem [resolvable:$true] %s654
      %s656 = sshll.u32 %s5, 4
      %s657 = int_to_ptr.hbm [resolvable:$true] %s656
      %659 = dma.vmem_to_hbm [thread:$0]  %s655, 48, %s657, [#allocation3]
    $region25: #{tpu_custom_call.1} parent=1 // pred_fallthru
      _
    // Predicated region
    $region26: #{tpu_custom_call.1} parent=1 // pred_check
      _
    $region27: #{tpu_custom_call.1} parent=1 // pred_check_branch
      %661 = sbr.rel (0) target = $region29
    $region28: #{tpu_custom_call.1} parent=1 // pred_region
      %663 = dma.done [#allocation3], 48
    $region29: #{tpu_custom_call.1} parent=1 // pred_fallthru
      _
    %664 = vsyncpa [#allocation3], 1

</llo_original>
